<compile_context>
chip_gen: v6e
topology: v6e:2x2x1
jax: 0.10.0
libtpu: 0.0.40
codegen_flags: <defaults>
</compile_context>

<pallas_src>
import jax
import jax.numpy as jnp
from jax.experimental import pallas as pl
from jax.experimental.pallas import tpu as pltpu

LANE = 128         # TPU lane width: keep hidden / matmul dims as full 128-lane tiles
SUBLANE = 8        # f32 sublane granularity for the batch (second-to-last) dim
MAX_TILE_B = 1024  # batch rows per grid step for large batches (sweepable 512-2048)


def _round_up(n, m):
    return (n + m - 1) // m * m


def _pick_tile_b(batch):
    """Small batches: one step, minimal padding.  Large batches: 1024-row tiles
    (>=2 grid steps above 1024 rows, so v7x's two TensorCores both get work)."""
    if batch <= MAX_TILE_B:
        return _round_up(max(batch, SUBLANE), SUBLANE)
    return MAX_TILE_B


def baby_kernel(x_ref, w1_ref, b1_ref, w2_ref, b2_ref, out_ref):
    """(tile_b, IN) -> FC1 (VPU broadcast-FMA) -> ReLU -> FC2 (MXU) -> (tile_b, C)."""
    # ---- FC1 on the VPU: contraction dim (input_size, e.g. 2) is tiny, so a
    #      statically-unrolled broadcast-FMA beats an MXU matmul. ----
    acc = x_ref[:, 0:1] * w1_ref[0:1, :]                    # (tile_b,1)*(1,H_PAD)
    for k in range(1, x_ref.shape[1]):                      # static unroll over IN
        acc = acc + x_ref[:, k:k + 1] * w1_ref[k:k + 1, :]
    h = jnp.maximum(acc + b1_ref[...], 0.0)                 # bias + ReLU (VPU, f32)

    # ---- FC2 on the MXU: lane-dense (tile_b, H_PAD) @ (H_PAD, C_PAD), f32 acc. ----
    o = jnp.dot(h, w2_ref[...], preferred_element_type=jnp.float32)

    # ---- Store ONLY the real class columns; padded lanes never leave VMEM. ----
    n_cls = out_ref.shape[1]
    out_ref[...] = (o[:, :n_cls] + b2_ref[...]).astype(out_ref.dtype)


def pad_baby_params(w1, b1, w2, b2):
    """One-time (model-load) padding of parameters to lane-dense tiles.

    w1: (input_size, hidden)   b1: (hidden,)
    w2: (hidden, num_classes)  b2: (num_classes,)
    """
    in_dim, hidden = w1.shape
    num_classes = w2.shape[1]
    h_pad = _round_up(hidden, LANE)
    c_pad = _round_up(num_classes, LANE)

    w1p = jnp.zeros((in_dim, h_pad), w1.dtype).at[:, :hidden].set(w1)
    b1p = jnp.zeros((1, h_pad), b1.dtype).at[0, :hidden].set(b1)
    w2p = jnp.zeros((h_pad, c_pad), w2.dtype).at[:hidden, :num_classes].set(w2)
    b2r = b2.reshape(1, num_classes)          # unpadded: added after column slice
    return w1p, b1p, w2p, b2r


def baby_forward(x, w1p, b1p, w2p, b2r):
    """relu(x @ W1 + b1) @ W2 + b2, with pre-padded params from pad_baby_params."""
    B, in_dim = x.shape
    h_pad = w1p.shape[1]
    c_pad = w2p.shape[1]
    num_classes = b2r.shape[1]

    tile_b = _pick_tile_b(B)
    b_pad = _round_up(B, tile_b)

    # Pad only the ragged tail rows (no copy at all in the aligned case).
    xp = x if b_pad == B else jnp.pad(x, ((0, b_pad - B), (0, 0)))

    out = pl.pallas_call(
        baby_kernel,
        out_shape=jax.ShapeDtypeStruct((b_pad, num_classes), x.dtype),
        grid_spec=pltpu.PrefetchScalarGridSpec(
            num_scalar_prefetch=0,
            grid=(b_pad // tile_b,),
            in_specs=[
                pl.BlockSpec((tile_b, in_dim), lambda i: (i, 0)),   # x batch tile
                pl.BlockSpec((in_dim, h_pad), lambda i: (0, 0)),    # W1 (resident)
                pl.BlockSpec((1, h_pad), lambda i: (0, 0)),         # b1 (resident)
                pl.BlockSpec((h_pad, c_pad), lambda i: (0, 0)),     # W2 (resident)
                pl.BlockSpec((1, num_classes), lambda i: (0, 0)),   # b2 (resident)
            ],
            # Narrow (num_classes-wide) output: ~64x less HBM writeback than the
            # old padded-128-lane output; the masked 2-lane vst is the cheap side
            # of that trade at these sizes.
            out_specs=pl.BlockSpec((tile_b, num_classes), lambda i: (i, 0)),
        ),
        compiler_params=pltpu.CompilerParams(
            # batch tiles are independent -> shard across TensorCores on v7x
            dimension_semantics=("parallel",),
        ),
    )(xp, w1p, b1p, w2p, b2r)

    return out if b_pad == B else out[:B, :]


def baby_reference(x, w1, b1, w2, b2):
    h = jnp.maximum(x @ w1 + b1, 0.0)
    return h @ w2 + b2


if __name__ == "__main__":
    # Module hyperparameters (XOR-problem sizing, as in the original lab):
    input_size, hidden_size, num_classes = 2, 32, 2
    batch = 8

    key = jax.random.PRNGKey(0)
    kx, kw1, kb1, kw2, kb2, kx2 = jax.random.split(key, 6)

    # Deterministic inputs / params (mimics nn.Linear uniform init scale).
    x = jax.random.normal(kx, (batch, input_size), dtype=jnp.float32)
    lim1 = 1.0 / (input_size ** 0.5)
    w1 = jax.random.uniform(kw1, (input_size, hidden_size), jnp.float32, -lim1, lim1)
    b1 = jax.random.uniform(kb1, (hidden_size,), jnp.float32, -lim1, lim1)
    lim2 = 1.0 / (hidden_size ** 0.5)
    w2 = jax.random.uniform(kw2, (hidden_size, num_classes), jnp.float32, -lim2, lim2)
    b2 = jax.random.uniform(kb2, (num_classes,), jnp.float32, -lim2, lim2)

    # One-time parameter padding (hoisted out of the per-call forward path).
    params = pad_baby_params(w1, b1, w2, b2)
    fwd = jax.jit(baby_forward)

    # Small XOR-sized batch: single grid step, no batch/x padding at all.
    out = jax.block_until_ready(fwd(x, *params))
    ref = baby_reference(x, w1, b1, w2, b2)
    assert out.shape == (batch, num_classes)
    assert jnp.allclose(out, ref, atol=1e-5, rtol=1e-5)

    # Larger ragged batch: exercises MAX_TILE_B tiling, a multi-step "parallel"
    # grid and tail-row padding/slicing.
    big_batch = 2500
    xb = jax.random.normal(kx2, (big_batch, input_size), dtype=jnp.float32)
    out_b = jax.block_until_ready(fwd(xb, *params))
    ref_b = baby_reference(xb, w1, b1, w2, b2)
    assert out_b.shape == (big_batch, num_classes)
    assert jnp.allclose(out_b, ref_b, atol=1e-5, rtol=1e-5)

    print("KERNEL_OK")
</pallas_src>

<mosaic_0001>
module attributes {stable_mosaic.version = 11 : i64} {
  func.func @baby_kernel(%arg0: i32, %arg1: memref<8x2xf32, #tpu.memory_space<vmem>>, %arg2: memref<2x128xf32, #tpu.memory_space<vmem>>, %arg3: memref<1x128xf32, #tpu.memory_space<vmem>>, %arg4: memref<128x128xf32, #tpu.memory_space<vmem>>, %arg5: memref<1x2xf32, #tpu.memory_space<vmem>>, %arg6: memref<8x2xf32, #tpu.memory_space<vmem>>) attributes {dimension_semantics = [#tpu.dimension_semantics<parallel>], iteration_bounds = array<i64: 1>, scalar_prefetch = 0 : i64, scratch_operands = 0 : i64, tpu.core_type = #tpu.core_type<tc>, window_params = [{transform_indices = @transform_0, window_bounds = array<i64: 8, 2>}, {pipeline_mode = #tpu.pipeline_mode<synchronous>, transform_indices = @transform_1, window_bounds = array<i64: 2, 128>}, {pipeline_mode = #tpu.pipeline_mode<synchronous>, transform_indices = @transform_2, window_bounds = array<i64: 1, 128>}, {pipeline_mode = #tpu.pipeline_mode<synchronous>, transform_indices = @transform_3, window_bounds = array<i64: 128, 128>}, {pipeline_mode = #tpu.pipeline_mode<synchronous>, transform_indices = @transform_4, window_bounds = array<i64: 1, 2>}, {transform_indices = @transform_5, window_bounds = array<i64: 8, 2>}]} {
    %c0 = arith.constant 0 : index
    %c0_0 = arith.constant 0 : index
    %0 = vector.load %arg1[%c0, %c0_0] : memref<8x2xf32, #tpu.memory_space<vmem>>, vector<8x1xf32>
    %c0_1 = arith.constant 0 : index
    %c0_2 = arith.constant 0 : index
    %1 = vector.load %arg2[%c0_1, %c0_2] : memref<2x128xf32, #tpu.memory_space<vmem>>, vector<1x128xf32>
    %2 = vector.broadcast %0 : vector<8x1xf32> to vector<8x128xf32>
    %3 = vector.broadcast %1 : vector<1x128xf32> to vector<8x128xf32>
    %4 = arith.mulf %2, %3 : vector<8x128xf32>
    %c0_3 = arith.constant 0 : index
    %c1 = arith.constant 1 : index
    %5 = vector.load %arg1[%c0_3, %c1] : memref<8x2xf32, #tpu.memory_space<vmem>>, vector<8x1xf32>
    %c1_4 = arith.constant 1 : index
    %c0_5 = arith.constant 0 : index
    %6 = vector.load %arg2[%c1_4, %c0_5] : memref<2x128xf32, #tpu.memory_space<vmem>>, vector<1x128xf32>
    %7 = vector.broadcast %5 : vector<8x1xf32> to vector<8x128xf32>
    %8 = vector.broadcast %6 : vector<1x128xf32> to vector<8x128xf32>
    %9 = arith.mulf %7, %8 : vector<8x128xf32>
    %10 = arith.addf %4, %9 : vector<8x128xf32>
    %c0_6 = arith.constant 0 : index
    %c0_7 = arith.constant 0 : index
    %11 = vector.load %arg3[%c0_6, %c0_7] : memref<1x128xf32, #tpu.memory_space<vmem>>, vector<1x128xf32>
    %12 = vector.broadcast %11 : vector<1x128xf32> to vector<8x128xf32>
    %13 = arith.addf %10, %12 : vector<8x128xf32>
    %cst = arith.constant 0.000000e+00 : f32
    %14 = vector.broadcast %cst : f32 to vector<8x128xf32>
    %15 = arith.maximumf %13, %14 : vector<8x128xf32>
    %c0_8 = arith.constant 0 : index
    %c0_9 = arith.constant 0 : index
    %16 = vector.load %arg4[%c0_8, %c0_9] : memref<128x128xf32, #tpu.memory_space<vmem>>, vector<128x128xf32>
    %cst_10 = arith.constant dense<0.000000e+00> : vector<8x128xf32>
    %17 = tpu.matmul %15, %16, %cst_10 {dimension_numbers = #tpu.dot_dimension_numbers<[1], [0], [0], [1], [0, 0, 1, 1], [], []>} : vector<8x128xf32>, vector<128x128xf32>, vector<8x128xf32> -> vector<8x128xf32>
    %18 = vector.extract_strided_slice %17 {offsets = [0, 0], sizes = [8, 2], strides = [1, 1]} : vector<8x128xf32> to vector<8x2xf32>
    %c0_11 = arith.constant 0 : index
    %c0_12 = arith.constant 0 : index
    %19 = vector.load %arg5[%c0_11, %c0_12] : memref<1x2xf32, #tpu.memory_space<vmem>>, vector<1x2xf32>
    %20 = vector.broadcast %19 : vector<1x2xf32> to vector<8x2xf32>
    %21 = arith.addf %18, %20 : vector<8x2xf32>
    %c0_13 = arith.constant 0 : index
    %c0_14 = arith.constant 0 : index
    %22 = vector.load %arg6[%c0_13, %c0_14] : memref<8x2xf32, #tpu.memory_space<vmem>>, vector<8x2xf32>
    tpu.vector_store %arg6[%c0_13, %c0_14], %21 {strides = array<i32>} : memref<8x2xf32, #tpu.memory_space<vmem>>, vector<8x2xf32>,
    return
  }
  func.func @transform_0(%arg0: i32) -> (i32, i32) {
    %c0_i32 = arith.constant 0 : i32
    %c0_i32_0 = arith.constant 0 : i32
    return %arg0, %c0_i32 : i32, i32
  }
  func.func @transform_1(%arg0: i32) -> (i32, i32) {
    %c0_i32 = arith.constant 0 : i32
    %c0_i32_0 = arith.constant 0 : i32
    %c0_i32_1 = arith.constant 0 : i32
    return %c0_i32, %c0_i32_0 : i32, i32
  }
  func.func @transform_2(%arg0: i32) -> (i32, i32) {
    %c0_i32 = arith.constant 0 : i32
    %c0_i32_0 = arith.constant 0 : i32
    %c0_i32_1 = arith.constant 0 : i32
    return %c0_i32, %c0_i32_0 : i32, i32
  }
  func.func @transform_3(%arg0: i32) -> (i32, i32) {
    %c0_i32 = arith.constant 0 : i32
    %c0_i32_0 = arith.constant 0 : i32
    %c0_i32_1 = arith.constant 0 : i32
    return %c0_i32, %c0_i32_0 : i32, i32
  }
  func.func @transform_4(%arg0: i32) -> (i32, i32) {
    %c0_i32 = arith.constant 0 : i32
    %c0_i32_0 = arith.constant 0 : i32
    %c0_i32_1 = arith.constant 0 : i32
    return %c0_i32, %c0_i32_0 : i32, i32
  }
  func.func @transform_5(%arg0: i32) -> (i32, i32) {
    %c0_i32 = arith.constant 0 : i32
    %c0_i32_0 = arith.constant 0 : i32
    return %arg0, %c0_i32 : i32, i32
  }
}

</mosaic_0001>

<llo_original>
// kernel: baby_forward.1
$region0: #{baby_forward.1}
  #allocation0 [shape = 'u32[]', space=smem, size = 0x4, offset = 0x4, fixed_abs, tag = 'smem constant byte address 0x4 - core index']
  #allocation1 [shape = 'u32[144,128]{1,0:T(1,128)}', space=vmem, size = 0x12000, scoped, tag = 'internal scratch']
  %s0 = inlined_call_operand.vmem [shape: f32[8,2], index: 0, kind: input, shape index: {}]
  %s1 = inlined_call_operand.vmem [shape: f32[2,128], index: 1, kind: input, shape index: {}]
  %s2 = inlined_call_operand.vmem [shape: f32[1,128], index: 2, kind: input, shape index: {}]
  %s3 = inlined_call_operand.hbm [shape: f32[128,128], index: 3, kind: input, shape index: {}]
  %s4 = inlined_call_operand.vmem [shape: f32[1,2], index: 4, kind: input, shape index: {}]
  %s5 = inlined_call_operand.vmem [shape: f32[8,2], index: 5, kind: output, shape index: {}]
  %s6 = sld [smem:[#allocation0]]
  $region34: #{baby_forward.1} parent=0
    _
  %s8 = ssub.s32 1, %s6
  %s9 = scalar_select 0, %s8, %s6
  $region1: #{baby_forward.1} parent=0
    #allocation2 [shape = 'u8[65536]{0}', space=vmem, size = 0x10000, scoped, tag = 'input window, operand 3, single buffered']
    #allocation3 [shape = 's32[1]{0}', space=sflag, size = 0x4, scoped, tag = 'scoped memory for baby_forward.1']
    %10 = vsyncpa [#allocation3], 0
    // Predicated region
    $region2: #{baby_forward.1} parent=1 // pred_check
      _
    $region3: #{baby_forward.1} parent=1 // pred_check_branch
      %12 = sbr.rel (0) target = $region5
    $region4: #{baby_forward.1} parent=1 // pred_region
      _
    $region5: #{baby_forward.1} parent=1 // pred_fallthru
      _
    // Predicated region
    $region6: #{baby_forward.1} parent=1 // pred_check
      _
    $region7: #{baby_forward.1} parent=1 // pred_check_branch
      %14 = sbr.rel (0) target = $region9
    $region8: #{baby_forward.1} parent=1 // pred_region
      _
    $region9: #{baby_forward.1} parent=1 // pred_fallthru
      _
    // Predicated region
    $region10: #{baby_forward.1} parent=1 // pred_check
      _
    $region11: #{baby_forward.1} parent=1 // pred_check_branch
      %16 = sbr.rel (0) target = $region13
    $region12: #{baby_forward.1} parent=1 // pred_region
      _
    $region13: #{baby_forward.1} parent=1 // pred_fallthru
      _
    // Predicated region
    $region14: #{baby_forward.1} parent=1 // pred_check
      _
    $region15: #{baby_forward.1} parent=1 // pred_check_branch
      %18 = sbr.rel (0) target = $region17
    $region16: #{baby_forward.1} parent=1 // pred_region
      %s20 = ssub.s32 2048, 2048
      %21 = vsyncadd [#allocation3], %s20
      %s22 = sshll.u32 [#allocation2], 4
      %s23 = int_to_ptr.vmem [resolvable:$true] %s22
      %28 = dma.hbm_to_vmem [thread:$0]  %s3, 2048, %s23, [#allocation3], 128, 128, 8
    $region17: #{baby_forward.1} parent=1 // pred_fallthru
      _
    // Predicated region
    $region18: #{baby_forward.1} parent=1 // pred_check
      _
    $region19: #{baby_forward.1} parent=1 // pred_check_branch
      %30 = sbr.rel (0) target = $region21
    $region20: #{baby_forward.1} parent=1 // pred_region
      _
    $region21: #{baby_forward.1} parent=1 // pred_fallthru
      _
    // Predicated region
    $region22: #{baby_forward.1} parent=1 // pred_check
      _
    $region23: #{baby_forward.1} parent=1 // pred_check_branch
      %32 = sbr.rel (0) target = $region25
    $region24: #{baby_forward.1} parent=1 // pred_region
      %33 = dma.done [#allocation3], 2048
    $region25: #{baby_forward.1} parent=1 // pred_fallthru
      _
    %v34 = vld [vmem:[%s0] sm:$0xff]
    %v35 = vld [vmem:[%s1] sm:$0x1]
    %37 = vset.pattern.permute.xlu0 0
    %38 = vperm.xlu0 %37, %v34
    %v39 = vpop.permute.xlu0 %38
    %v41 = vlaneseq
    %v42 = vshrl.u32 %v41, 7
    %v43 = vsub.s32 0, %v42
    %v44 = vrot.slane %v35, %v43
    %v45 = vmul.f32 %v39, %v44
    %v46 = vld [vmem:[%s1 + $0x1] sm:$0x1]
    %47 = vset.pattern.permute.xlu0 1
    %48 = vperm.xlu0 %47, %v34
    %v49 = vpop.permute.xlu0 %48
    %v51 = vlaneseq
    %v52 = vshrl.u32 %v51, 7
    %v53 = vsub.s32 0, %v52
    %v54 = vrot.slane %v46, %v53
    %v55 = vmul.f32 %v49, %v54
    %v56 = vadd.f32 %v45, %v55
    %v57 = vld [vmem:[%s2] sm:$0x1]
    %v59 = vlaneseq
    %v60 = vshrl.u32 %v59, 7
    %v61 = vsub.s32 0, %v60
    %v62 = vrot.slane %v57, %v61
    %v64 = vadd.f32 %v56, %v62
    %v65 = vmax.f32 %v64, 0.0
    %v66 = vld [vmem:[#allocation2] sm:$0xff]
    %v67 = vld [vmem:[#allocation2 + $0x8] sm:$0xff]
    %v68 = vld [vmem:[#allocation2 + $0x10] sm:$0xff]
    %v69 = vld [vmem:[#allocation2 + $0x18] sm:$0xff]
    %v70 = vld [vmem:[#allocation2 + $0x20] sm:$0xff]
    %v71 = vld [vmem:[#allocation2 + $0x28] sm:$0xff]
    %v72 = vld [vmem:[#allocation2 + $0x30] sm:$0xff]
    %v73 = vld [vmem:[#allocation2 + $0x38] sm:$0xff]
    %v74 = vld [vmem:[#allocation2 + $0x40] sm:$0xff]
    %v75 = vld [vmem:[#allocation2 + $0x48] sm:$0xff]
    %v76 = vld [vmem:[#allocation2 + $0x50] sm:$0xff]
    %v77 = vld [vmem:[#allocation2 + $0x58] sm:$0xff]
    %v78 = vld [vmem:[#allocation2 + $0x60] sm:$0xff]
    %v79 = vld [vmem:[#allocation2 + $0x68] sm:$0xff]
    %v80 = vld [vmem:[#allocation2 + $0x70] sm:$0xff]
    %v81 = vld [vmem:[#allocation2 + $0x78] sm:$0xff]
    %82 = vmatprep.subr.mxu0 0.0
    %83 = vmatpush1.msra.mxu0 %v81
    %84 = vmatprep.subr.mxu0 0.0
    %85 = vmatpush1.msra.mxu0 %v80
    %86 = vmatprep.subr.mxu0 0.0
    %87 = vmatpush1.msra.mxu0 %v79
    %88 = vmatprep.subr.mxu0 0.0
    %89 = vmatpush1.msra.mxu0 %v78
    %90 = vmatprep.subr.mxu0 0.0
    %91 = vmatpush1.msra.mxu0 %v77
    %92 = vmatprep.subr.mxu0 0.0
    %93 = vmatpush1.msra.mxu0 %v76
    %94 = vmatprep.subr.mxu0 0.0
    %95 = vmatpush1.msra.mxu0 %v75
    %96 = vmatprep.subr.mxu0 0.0
    %97 = vmatpush1.msra.mxu0 %v74
    %98 = vmatprep.subr.mxu0 0.0
    %99 = vmatpush1.msra.mxu0 %v73
    %100 = vmatprep.subr.mxu0 0.0
    %101 = vmatpush1.msra.mxu0 %v72
    %102 = vmatprep.subr.mxu0 0.0
    %103 = vmatpush1.msra.mxu0 %v71
    %104 = vmatprep.subr.mxu0 0.0
    %105 = vmatpush1.msra.mxu0 %v70
    %106 = vmatprep.subr.mxu0 0.0
    %107 = vmatpush1.msra.mxu0 %v69
    %108 = vmatprep.subr.mxu0 0.0
    %109 = vmatpush1.msra.mxu0 %v68
    %110 = vmatprep.subr.mxu0 0.0
    %111 = vmatpush1.msra.mxu0 %v67
    %112 = vmatprep.subr.mxu0 0.0
    %113 = vmatpush1.msra.mxu0 %v66
    %114 = vmatprep.subr.mxu0 0.0
    %115 = vmatpush2.msra.mxu0 0.0
    %116 = vmatprep.subr.mxu0 0.0
    %117 = vmatpush2.msra.mxu0 0.0
    %118 = vmatprep.subr.mxu0 0.0
    %119 = vmatpush2.msra.mxu0 0.0
    %120 = vmatprep.subr.mxu0 0.0
    %121 = vmatpush2.msra.mxu0 0.0
    %122 = vmatprep.subr.mxu0 0.0
    %123 = vmatpush2.msra.mxu0 0.0
    %124 = vmatprep.subr.mxu0 0.0
    %125 = vmatpush2.msra.mxu0 0.0
    %126 = vmatprep.subr.mxu0 0.0
    %127 = vmatpush2.msra.mxu0 0.0
    %128 = vmatprep.subr.mxu0 0.0
    %129 = vmatpush2.msra.mxu0 0.0
    %130 = vmatprep.subr.mxu0 0.0
    %131 = vmatpush2.msra.mxu0 0.0
    %132 = vmatprep.subr.mxu0 0.0
    %133 = vmatpush2.msra.mxu0 0.0
    %134 = vmatprep.subr.mxu0 0.0
    %135 = vmatpush2.msra.mxu0 0.0
    %136 = vmatprep.subr.mxu0 0.0
    %137 = vmatpush2.msra.mxu0 0.0
    %138 = vmatprep.subr.mxu0 0.0
    %139 = vmatpush2.msra.mxu0 0.0
    %140 = vmatprep.subr.mxu0 0.0
    %141 = vmatpush2.msra.mxu0 0.0
    %142 = vmatprep.subr.mxu0 0.0
    %143 = vmatpush2.msra.mxu0 0.0
    %144 = vmatprep.subr.mxu0 0.0
    %145 = vmatpush2.msra.mxu0 0.0
    %146 = vmatprep.mubr.f32.mxu0 0.0
    %147 = vmatmul.mubr.f32.gmra.mxu0 %v65
    %v148 = vpop.f32.mrf.mxu0
    %v149 = vadd.f32 0.0, %v148
    %v150 = vpop.f32.mrf.mxu0
    %151 = vdwg.mxu0
    %v152 = vld [vmem:[%s4] sm:$0x1]
    %v154 = vlaneseq
    %v155 = vshrl.u32 %v154, 7
    %v156 = vsub.s32 0, %v155
    %v157 = vrot.slane %v152, %v156
    %v159 = vadd.f32 %v149, %v157
    %vm160 = vcmask 15360
    %161 = vst.msk [vmem:[%s5] sm:$0xff] %vm160, %v159
    // Predicated region
    $region26: #{baby_forward.1} parent=1 // pred_check
      _
    $region27: #{baby_forward.1} parent=1 // pred_check_branch
      %163 = sbr.rel (0) target = $region29
    $region28: #{baby_forward.1} parent=1 // pred_region
      _
    $region29: #{baby_forward.1} parent=1 // pred_fallthru
      _
    // Predicated region
    $region30: #{baby_forward.1} parent=1 // pred_check
      _
    $region31: #{baby_forward.1} parent=1 // pred_check_branch
      %165 = sbr.rel (0) target = $region33
    $region32: #{baby_forward.1} parent=1 // pred_region
      _
    $region33: #{baby_forward.1} parent=1 // pred_fallthru
      _
    %166 = vsyncpa [#allocation3], 1

</llo_original>
